<compile_context>
chip_gen: v7x
topology: tpu7x:2x2x1
jax: 0.10.0
libtpu: 0.0.40
codegen_flags: <defaults>
</compile_context>

<pallas_src>
import functools

import jax
import jax.numpy as jnp
import numpy as np
from jax import lax
from jax.experimental import pallas as pl
from jax.experimental.pallas import tpu as pltpu


# ---------------- fused Pallas kernel ----------------

def bottleneck_kernel(x_ref, mask_ref, w1_ref, w2_ref, o_ref, *, W, BHW, Ch):
    x = x_ref[...]                                       # (Cpad, BHW) f32

    # conv1: 1x1 conv; BN scale folded into w1, bias folded in via the
    # constant-ones row of x.  Then SiLU.
    y1 = jnp.dot(w1_ref[...], x, preferred_element_type=jnp.float32)
    y1 = y1 * jax.nn.sigmoid(y1)                         # (Cpad, BHW)

    # Inject a constant-ones row at channel index Ch: it carries the conv2
    # bias through the MXU (w2 weights it only on the centre tap, whose mask
    # is identically 1).
    ridx = lax.broadcasted_iota(jnp.int32, y1.shape, 0)
    y1 = jnp.where(ridx == Ch, jnp.float32(1.0), y1)

    # conv2: 3x3 conv (pad=1) as ONE K = 9*Cpad contraction.  Each tap is a
    # cheap XLU lane roll of the flattened y1; stacking 8-row pieces is pure
    # vreg concatenation.  One co-layout multiply applies the zero-padding
    # masks (which also kill taps that wrapped into the neighbouring image).
    taps = []
    for dy in range(3):
        for dx in range(3):
            s = (dy - 1) * W + (dx - 1)                  # flat source offset
            taps.append(y1 if s == 0
                        else pltpu.roll(y1, shift=(-s) % BHW, axis=1))
    patches = jnp.concatenate(taps, axis=0)              # (9*Cpad, BHW)
    patches = patches * mask_ref[...]

    y2 = jnp.dot(w2_ref[...], patches, preferred_element_type=jnp.float32)
    y2 = y2 * jax.nn.sigmoid(y2)                         # (Cpad, BHW)

    # residual add (shortcut and in_channels == out_channels).  Padded rows
    # of the output are junk and get sliced off in the wrapper.
    o_ref[...] = (y2 + x).astype(o_ref.dtype)


# ---------------- wrapper ----------------

def bottleneck_forward(x_nchw, params):
    (w1, s1, b1, w2, s2, b2) = params
    B, C, H, W = x_nchw.shape
    Ch = w1.shape[1]
    Cout = w2.shape[-1]
    HW = H * W
    BHW = B * HW
    CP = 8                                # pad every channel dim to one vreg of sublanes
    assert C + 1 <= CP and Ch + 1 <= CP and Cout <= CP

    # ---- trace-time parameter folding (all tiny, outside the kernel) ----
    # conv1: BN scale into weights; bias as an extra K column (hits the ones row).
    w1f = jnp.concatenate([(w1 * s1[None, :]).T, b1.reshape(Ch, 1)],
                          axis=1).astype(jnp.float32)            # (Ch, C+1)
    w1f = jnp.pad(w1f, ((0, CP - Ch), (0, CP - (C + 1))))        # (CP, CP)

    # conv2: (3,3,Ch,Cout)*scale -> (Cout, 9, CP); bias on the constant row
    # (channel index Ch) of the centre tap (k = 4); pad Cout -> CP.
    w2s = jnp.transpose((w2 * s2).reshape(9, Ch, Cout), (2, 0, 1))  # (Cout, 9, Ch)
    w2s = jnp.pad(w2s, ((0, 0), (0, 0), (0, CP - Ch)))
    w2s = w2s.at[:, 4, Ch].set(b2)
    w2f = jnp.pad(w2s.reshape(Cout, 9 * CP),
                  ((0, CP - Cout), (0, 0))).astype(jnp.float32)     # (CP, 9*CP)

    # 3x3 zero-padding masks, pre-broadcast to the patch layout (9*CP, BHW).
    q = jnp.arange(BHW, dtype=jnp.int32)
    p = q % HW
    row, col = p // W, p % W
    mrows = []
    for dy in range(3):
        for dx in range(3):
            valid = ((row + dy - 1 >= 0) & (row + dy - 1 < H) &
                     (col + dx - 1 >= 0) & (col + dx - 1 < W))
            mrows.append(jnp.broadcast_to(valid.astype(jnp.float32)[None, :],
                                          (CP, BHW)))
    mask = jnp.concatenate(mrows, axis=0)                           # (9*CP, BHW)

    # Whole batch as one lane-dense slab: (C, B*HW), plus ones row (conv1
    # bias) and zero channel padding.  Transpose+pad is ~8 KB, trivial.
    x_cb = jnp.transpose(x_nchw, (1, 0, 2, 3)).reshape(C, BHW).astype(jnp.float32)
    x_in = jnp.concatenate(
        [x_cb,
         jnp.ones((1, BHW), jnp.float32),
         jnp.zeros((CP - C - 1, BHW), jnp.float32)], axis=0)        # (CP, BHW)

    kernel = functools.partial(bottleneck_kernel, W=W, BHW=BHW, Ch=Ch)

    out = pl.pallas_call(
        kernel,
        out_shape=jax.ShapeDtypeStruct((CP, BHW), jnp.float32),
        grid=(1,),                                     # whole batch in one step
        in_specs=[
            pl.BlockSpec((CP, BHW), lambda i: (0, 0)),        # x (whole batch)
            pl.BlockSpec((9 * CP, BHW), lambda i: (0, 0)),    # tap masks
            pl.BlockSpec((CP, CP), lambda i: (0, 0)),         # w1 (+bias column)
            pl.BlockSpec((CP, 9 * CP), lambda i: (0, 0)),     # w2 (+bias column)
        ],
        out_specs=pl.BlockSpec((CP, BHW), lambda i: (0, 0)),
        compiler_params=pltpu.CompilerParams(
            dimension_semantics=("arbitrary",)),
    )(x_in, mask, w1f, w2f)

    y = out[:C].reshape(C, B, H, W)
    return jnp.transpose(y, (1, 0, 2, 3)).astype(x_nchw.dtype)


# ---------------- pure-JAX reference (for verification) ----------------

def bottleneck_ref(x_nchw, params):
    (w1, s1, b1, w2, s2, b2) = params
    Cin, Ch = w1.shape
    Cout = w2.shape[-1]

    def conv(x, w_oihw, pad):
        return lax.conv_general_dilated(
            x, w_oihw, window_strides=(1, 1),
            padding=[(pad, pad), (pad, pad)],
            dimension_numbers=('NCHW', 'OIHW', 'NCHW'))

    def silu(v):
        return v * jax.nn.sigmoid(v)

    w1_oihw = w1.T.reshape(Ch, Cin, 1, 1)
    w2_oihw = jnp.transpose(w2, (3, 2, 0, 1))      # (Cout, Ch, 3, 3)

    y = conv(x_nchw, w1_oihw, 0)
    y = silu(y * s1[None, :, None, None] + b1[None, :, None, None])
    y = conv(y, w2_oihw, 1)
    y = silu(y * s2[None, :, None, None] + b2[None, :, None, None])
    return y + x_nchw


# ---------------- parameter init + main ----------------

def make_params(key, cin, ch, cout, eps=1e-5):
    ks = jax.random.split(key, 10)

    def fold_bn(kg, kb, km, kv, c):
        gamma = jax.random.uniform(kg, (c,), jnp.float32, 0.5, 1.5)
        beta = 0.1 * jax.random.normal(kb, (c,), jnp.float32)
        mean = 0.1 * jax.random.normal(km, (c,), jnp.float32)
        var = jax.random.uniform(kv, (c,), jnp.float32, 0.5, 1.5)
        scale = gamma / jnp.sqrt(var + eps)
        bias = beta - mean * scale
        return scale, bias

    w1 = 0.1 * jax.random.normal(ks[0], (cin, ch), jnp.float32)         # 1x1 conv
    s1, b1 = fold_bn(ks[1], ks[2], ks[3], ks[4], ch)
    w2 = 0.1 * jax.random.normal(ks[5], (3, 3, ch, cout), jnp.float32)  # 3x3 conv (HWIO)
    s2, b2 = fold_bn(ks[6], ks[7], ks[8], ks[9], cout)
    return (w1, s1, b1, w2, s2, b2)


if __name__ == "__main__":
    B, C, H, W = 2, 4, 16, 16          # in_channels = out_channels = 4
    hidden = int(C * 0.5)              # expansion = 0.5 -> 2 hidden channels

    key = jax.random.PRNGKey(0)
    kx, kp = jax.random.split(key)
    x = jax.random.normal(kx, (B, C, H, W), jnp.float32)
    params = make_params(kp, C, hidden, C)

    y = bottleneck_forward(x, params)
    y = jax.block_until_ready(y)

    y_ref = bottleneck_ref(x, params)
    np.testing.assert_allclose(np.asarray(y), np.asarray(y_ref),
                               rtol=3e-5, atol=3e-5)
    print("KERNEL_OK")
</pallas_src>

<mosaic_0001>
module attributes {stable_mosaic.version = 11 : i64} {
  func.func @bottleneck_kernel(%arg0: i32, %arg1: memref<8x512xf32, #tpu.memory_space<vmem>>, %arg2: memref<72x512xf32, #tpu.memory_space<vmem>>, %arg3: memref<8x8xf32, #tpu.memory_space<vmem>>, %arg4: memref<8x72xf32, #tpu.memory_space<vmem>>, %arg5: memref<8x512xf32, #tpu.memory_space<vmem>>) attributes {dimension_semantics = [#tpu.dimension_semantics<arbitrary>], iteration_bounds = array<i64: 1>, scalar_prefetch = 0 : i64, scratch_operands = 0 : i64, tpu.core_type = #tpu.core_type<tc>, window_params = [{pipeline_mode = #tpu.pipeline_mode<synchronous>, transform_indices = @transform_0, window_bounds = array<i64: 8, 512>}, {pipeline_mode = #tpu.pipeline_mode<synchronous>, transform_indices = @transform_1, window_bounds = array<i64: 72, 512>}, {pipeline_mode = #tpu.pipeline_mode<synchronous>, transform_indices = @transform_2, window_bounds = array<i64: 8, 8>}, {pipeline_mode = #tpu.pipeline_mode<synchronous>, transform_indices = @transform_3, window_bounds = array<i64: 8, 72>}, {pipeline_mode = #tpu.pipeline_mode<synchronous>, transform_indices = @transform_4, window_bounds = array<i64: 8, 512>}]} {
    %c0 = arith.constant 0 : index
    %c0_0 = arith.constant 0 : index
    %0 = vector.load %arg1[%c0, %c0_0] : memref<8x512xf32, #tpu.memory_space<vmem>>, vector<8x512xf32>
    %c0_1 = arith.constant 0 : index
    %c0_2 = arith.constant 0 : index
    %1 = vector.load %arg3[%c0_1, %c0_2] : memref<8x8xf32, #tpu.memory_space<vmem>>, vector<8x8xf32>
    %cst = arith.constant dense<0.000000e+00> : vector<8x512xf32>
    %2 = tpu.matmul %1, %0, %cst {dimension_numbers = #tpu.dot_dimension_numbers<[1], [0], [0], [1], [0, 0, 1, 1], [], []>} : vector<8x8xf32>, vector<8x512xf32>, vector<8x512xf32> -> vector<8x512xf32>
    %3 = arith.negf %2 : vector<8x512xf32>
    %4 = math.exp %3 : vector<8x512xf32>
    %cst_3 = arith.constant 1.000000e+00 : f32
    %5 = vector.broadcast %cst_3 : f32 to vector<8x512xf32>
    %6 = arith.addf %5, %4 : vector<8x512xf32>
    %7 = arith.divf %5, %6 : vector<8x512xf32>
    %8 = arith.mulf %2, %7 : vector<8x512xf32>
    %9 = tpu.iota {dimensions = array<i32: 0>} : vector<8x512xi32>
    %c2_i32 = arith.constant 2 : i32
    %10 = vector.broadcast %c2_i32 : i32 to vector<8x512xi32>
    %11 = arith.cmpi eq, %9, %10 : vector<8x512xi32>
    %cst_4 = arith.constant 1.000000e+00 : f32
    %12 = vector.broadcast %cst_4 : f32 to vector<8x512xf32>
    %13 = arith.select %11, %12, %8 : vector<8x512xi1>, vector<8x512xf32>
    %c17_i32 = arith.constant 17 : i32
    %14 = tpu.dynamic_rotate %13 by %c17_i32 dim 1 : vector<8x512xf32>, i32 -> vector<8x512xf32>
    %c16_i32 = arith.constant 16 : i32
    %15 = tpu.dynamic_rotate %13 by %c16_i32 dim 1 : vector<8x512xf32>, i32 -> vector<8x512xf32>
    %c15_i32 = arith.constant 15 : i32
    %16 = tpu.dynamic_rotate %13 by %c15_i32 dim 1 : vector<8x512xf32>, i32 -> vector<8x512xf32>
    %c1_i32 = arith.constant 1 : i32
    %17 = tpu.dynamic_rotate %13 by %c1_i32 dim 1 : vector<8x512xf32>, i32 -> vector<8x512xf32>
    %c511_i32 = arith.constant 511 : i32
    %18 = tpu.dynamic_rotate %13 by %c511_i32 dim 1 : vector<8x512xf32>, i32 -> vector<8x512xf32>
    %c497_i32 = arith.constant 497 : i32
    %19 = tpu.dynamic_rotate %13 by %c497_i32 dim 1 : vector<8x512xf32>, i32 -> vector<8x512xf32>
    %c496_i32 = arith.constant 496 : i32
    %20 = tpu.dynamic_rotate %13 by %c496_i32 dim 1 : vector<8x512xf32>, i32 -> vector<8x512xf32>
    %c495_i32 = arith.constant 495 : i32
    %21 = tpu.dynamic_rotate %13 by %c495_i32 dim 1 : vector<8x512xf32>, i32 -> vector<8x512xf32>
    %22 = tpu.concatenate %14, %15, %16, %17, %13, %18, %19, %20, %21 in 0 : vector<8x512xf32>, vector<8x512xf32>, vector<8x512xf32>, vector<8x512xf32>, vector<8x512xf32>, vector<8x512xf32>, vector<8x512xf32>, vector<8x512xf32>, vector<8x512xf32> -> vector<72x512xf32>
    %c0_5 = arith.constant 0 : index
    %c0_6 = arith.constant 0 : index
    %23 = vector.load %arg2[%c0_5, %c0_6] : memref<72x512xf32, #tpu.memory_space<vmem>>, vector<72x512xf32>
    %24 = arith.mulf %22, %23 : vector<72x512xf32>
    %c0_7 = arith.constant 0 : index
    %c0_8 = arith.constant 0 : index
    %25 = vector.load %arg4[%c0_7, %c0_8] : memref<8x72xf32, #tpu.memory_space<vmem>>, vector<8x72xf32>
    %cst_9 = arith.constant dense<0.000000e+00> : vector<8x512xf32>
    %26 = tpu.matmul %25, %24, %cst_9 {dimension_numbers = #tpu.dot_dimension_numbers<[1], [0], [0], [1], [0, 0, 1, 1], [], []>} : vector<8x72xf32>, vector<72x512xf32>, vector<8x512xf32> -> vector<8x512xf32>
    %27 = arith.negf %26 : vector<8x512xf32>
    %28 = math.exp %27 : vector<8x512xf32>
    %cst_10 = arith.constant 1.000000e+00 : f32
    %29 = vector.broadcast %cst_10 : f32 to vector<8x512xf32>
    %30 = arith.addf %29, %28 : vector<8x512xf32>
    %31 = arith.divf %29, %30 : vector<8x512xf32>
    %32 = arith.mulf %26, %31 : vector<8x512xf32>
    %33 = arith.addf %32, %0 : vector<8x512xf32>
    %c0_11 = arith.constant 0 : index
    %c0_12 = arith.constant 0 : index
    %34 = vector.load %arg5[%c0_11, %c0_12] : memref<8x512xf32, #tpu.memory_space<vmem>>, vector<8x512xf32>
    tpu.vector_store %arg5[%c0_11, %c0_12], %33 {strides = array<i32>} : memref<8x512xf32, #tpu.memory_space<vmem>>, vector<8x512xf32>,
    return
  }
  func.func @transform_0(%arg0: i32) -> (i32, i32) {
    %c0_i32 = arith.constant 0 : i32
    %c0_i32_0 = arith.constant 0 : i32
    %c0_i32_1 = arith.constant 0 : i32
    return %c0_i32, %c0_i32_0 : i32, i32
  }
  func.func @transform_1(%arg0: i32) -> (i32, i32) {
    %c0_i32 = arith.constant 0 : i32
    %c0_i32_0 = arith.constant 0 : i32
    %c0_i32_1 = arith.constant 0 : i32
    return %c0_i32, %c0_i32_0 : i32, i32
  }
  func.func @transform_2(%arg0: i32) -> (i32, i32) {
    %c0_i32 = arith.constant 0 : i32
    %c0_i32_0 = arith.constant 0 : i32
    %c0_i32_1 = arith.constant 0 : i32
    return %c0_i32, %c0_i32_0 : i32, i32
  }
  func.func @transform_3(%arg0: i32) -> (i32, i32) {
    %c0_i32 = arith.constant 0 : i32
    %c0_i32_0 = arith.constant 0 : i32
    %c0_i32_1 = arith.constant 0 : i32
    return %c0_i32, %c0_i32_0 : i32, i32
  }
  func.func @transform_4(%arg0: i32) -> (i32, i32) {
    %c0_i32 = arith.constant 0 : i32
    %c0_i32_0 = arith.constant 0 : i32
    %c0_i32_1 = arith.constant 0 : i32
    return %c0_i32, %c0_i32_0 : i32, i32
  }
}

</mosaic_0001>

<llo_original>
// kernel: tpu_custom_call.1
$region0: #{tpu_custom_call.1}
  #allocation0 [shape = 'u32[]', space=smem, size = 0x4, offset = 0x4, fixed_abs, tag = 'smem constant byte address 0x4 - core index']
  #allocation1 [shape = 'u32[144,128]{1,0:T(1,128)}', space=vmem, size = 0x12000, scoped, tag = 'internal scratch']
  %s0 = inlined_call_operand.hbm [shape: f32[8,512], index: 0, kind: input, shape index: {}]
  %s1 = inlined_call_operand.hbm [shape: f32[72,512], index: 1, kind: input, shape index: {}]
  %s2 = inlined_call_operand.hbm [shape: f32[8,8], index: 2, kind: input, shape index: {}]
  %s3 = inlined_call_operand.vmem [shape: f32[8,72], index: 3, kind: input, shape index: {}]
  %s4 = inlined_call_operand.hbm [shape: f32[8,512], index: 4, kind: output, shape index: {}]
  %s5 = sld [smem:[#allocation0]]
  $region38: #{tpu_custom_call.1} parent=0
    _
  %s7 = ssub.s32 1, %s5
  %s8 = scalar_select 0, %s7, %s5
  $region1: #{tpu_custom_call.1} parent=0
    #allocation2 [shape = 'u8[16384]{0}', space=vmem, size = 0x4000, scoped, tag = 'input window, operand 0, single buffered']
    #allocation3 [shape = 's32[1]{0}', space=sflag, size = 0x4, scoped, tag = 'scoped memory for tpu_custom_call.1']
    #allocation4 [shape = 's32[1]{0}', space=sflag, size = 0x4, scoped, tag = 'scoped memory for tpu_custom_call.1']
    #allocation5 [shape = 'u8[147456]{0}', space=vmem, size = 0x24000, scoped, tag = 'input window, operand 1, single buffered']
    #allocation6 [shape = 's32[1]{0}', space=sflag, size = 0x4, scoped, tag = 'scoped memory for tpu_custom_call.1']
    #allocation7 [shape = 'u8[4096]{0}', space=vmem, size = 0x1000, scoped, tag = 'input window, operand 2, single buffered']
    #allocation8 [shape = 'u8[16384]{0}', space=vmem, size = 0x4000, scoped, tag = 'output window, operand 0, single buffered']
    %9 = vsyncpa [#allocation3], 0
    %10 = vsyncpa [#allocation6], 0
    %11 = vsyncpa [#allocation4], 0
    // Predicated region
    $region2: #{tpu_custom_call.1} parent=1 // pred_check
      _
    $region3: #{tpu_custom_call.1} parent=1 // pred_check_branch
      %13 = sbr.rel (0) target = $region5
    $region4: #{tpu_custom_call.1} parent=1 // pred_region
      %s15 = ssub.s32 512, 512
      %16 = vsyncadd [#allocation3], %s15
      %s18 = sshll.u32 [#allocation2], 4
      %s19 = int_to_ptr.vmem [resolvable:$true] %s18
      %21 = dma.hbm_to_vmem [thread:$0]  %s0, 512, %s19, [#allocation3]
    $region5: #{tpu_custom_call.1} parent=1 // pred_fallthru
      _
    // Predicated region
    $region6: #{tpu_custom_call.1} parent=1 // pred_check
      _
    $region7: #{tpu_custom_call.1} parent=1 // pred_check_branch
      %23 = sbr.rel (0) target = $region9
    $region8: #{tpu_custom_call.1} parent=1 // pred_region
      %s25 = ssub.s32 4608, 4608
      %26 = vsyncadd [#allocation6], %s25
      %s27 = sshll.u32 [#allocation5], 4
      %s28 = int_to_ptr.vmem [resolvable:$true] %s27
      %33 = dma.hbm_to_vmem [thread:$0]  %s1, 4608, %s28, [#allocation6], 512, 512, 32
    $region9: #{tpu_custom_call.1} parent=1 // pred_fallthru
      _
    // Predicated region
    $region10: #{tpu_custom_call.1} parent=1 // pred_check
      _
    $region11: #{tpu_custom_call.1} parent=1 // pred_check_branch
      %35 = sbr.rel (0) target = $region13
    $region12: #{tpu_custom_call.1} parent=1 // pred_region
      %s37 = ssub.s32 128, 128
      %38 = vsyncadd [#allocation6], %s37
      %s40 = sshll.u32 [#allocation7], 4
      %s41 = int_to_ptr.vmem [resolvable:$true] %s40
      %43 = dma.hbm_to_vmem [thread:$0]  %s2, 128, %s41, [#allocation6]
    $region13: #{tpu_custom_call.1} parent=1 // pred_fallthru
      _
    // Predicated region
    $region14: #{tpu_custom_call.1} parent=1 // pred_check
      _
    $region15: #{tpu_custom_call.1} parent=1 // pred_check_branch
      %45 = sbr.rel (0) target = $region17
    $region16: #{tpu_custom_call.1} parent=1 // pred_region
      _
    $region17: #{tpu_custom_call.1} parent=1 // pred_fallthru
      _
    // Predicated region
    $region18: #{tpu_custom_call.1} parent=1 // pred_check
      _
    $region19: #{tpu_custom_call.1} parent=1 // pred_check_branch
      %47 = sbr.rel (0) target = $region21
    $region20: #{tpu_custom_call.1} parent=1 // pred_region
      %48 = dma.done [#allocation3], 512
    $region21: #{tpu_custom_call.1} parent=1 // pred_fallthru
      _
    // Predicated region
    $region22: #{tpu_custom_call.1} parent=1 // pred_check
      _
    $region23: #{tpu_custom_call.1} parent=1 // pred_check_branch
      %50 = sbr.rel (0) target = $region25
    $region24: #{tpu_custom_call.1} parent=1 // pred_region
      %51 = dma.done [#allocation6], 4608
    $region25: #{tpu_custom_call.1} parent=1 // pred_fallthru
      _
    // Predicated region
    $region26: #{tpu_custom_call.1} parent=1 // pred_check
      _
    $region27: #{tpu_custom_call.1} parent=1 // pred_check_branch
      %53 = sbr.rel (0) target = $region29
    $region28: #{tpu_custom_call.1} parent=1 // pred_region
      %54 = dma.done [#allocation6], 128
    $region29: #{tpu_custom_call.1} parent=1 // pred_fallthru
      _
    %v55 = vld [vmem:[#allocation2] sm:$0xff]
    %v56 = vld [vmem:[#allocation2 + $0x8] sm:$0xff]
    %v57 = vld [vmem:[#allocation2 + $0x10] sm:$0xff]
    %v58 = vld [vmem:[#allocation2 + $0x18] sm:$0xff]
    %v59 = vld [vmem:[#allocation7] sm:$0xff]
    %vm60 = vcmask 64512
    %v62 = vsel %vm60, %v59, 0
    %64 = vmatprep.subr.mxu0 %v56
    %65 = vmatpush1.msra.mxu0 %v55
    %66 = vmatprep.subr.mxu0 0.0
    %67 = vmatpush1.msra.mxu0 0.0
    %68 = vmatprep.subr.mxu0 0.0
    %69 = vmatpush1.msra.mxu0 0.0
    %70 = vmatprep.subr.mxu0 0.0
    %71 = vmatpush1.msra.mxu0 0.0
    %72 = vmatprep.subr.mxu0 0.0
    %73 = vmatpush1.msra.mxu0 0.0
    %74 = vmatprep.subr.mxu0 0.0
    %75 = vmatpush1.msra.mxu0 0.0
    %76 = vmatprep.subr.mxu0 0.0
    %77 = vmatpush1.msra.mxu0 0.0
    %78 = vmatprep.subr.mxu0 0.0
    %79 = vmatpush1.msra.mxu0 0.0
    %80 = vmatprep.subr.mxu0 0.0
    %81 = vmatpush1.msra.mxu0 0.0
    %82 = vmatprep.subr.mxu0 0.0
    %83 = vmatpush1.msra.mxu0 0.0
    %84 = vmatprep.subr.mxu0 0.0
    %85 = vmatpush1.msra.mxu0 0.0
    %86 = vmatprep.subr.mxu0 0.0
    %87 = vmatpush1.msra.mxu0 0.0
    %88 = vmatprep.subr.mxu0 0.0
    %89 = vmatpush1.msra.mxu0 0.0
    %90 = vmatprep.subr.mxu0 0.0
    %91 = vmatpush1.msra.mxu0 0.0
    %92 = vmatprep.subr.mxu0 0.0
    %93 = vmatpush1.msra.mxu0 0.0
    %94 = vmatprep.subr.mxu0 0.0
    %95 = vmatpush1.msra.mxu0 0.0
    %96 = vmatprep.subr.mxu0 0.0
    %97 = vmatpush1.msra.mxu0 0.0
    %98 = vmatprep.subr.mxu0 0.0
    %99 = vmatpush1.msra.mxu0 0.0
    %100 = vmatprep.subr.mxu0 0.0
    %101 = vmatpush1.msra.mxu0 0.0
    %102 = vmatprep.subr.mxu0 0.0
    %103 = vmatpush1.msra.mxu0 0.0
    %104 = vmatprep.subr.mxu0 0.0
    %105 = vmatpush1.msra.mxu0 0.0
    %106 = vmatprep.subr.mxu0 0.0
    %107 = vmatpush1.msra.mxu0 0.0
    %108 = vmatprep.subr.mxu0 0.0
    %109 = vmatpush1.msra.mxu0 0.0
    %110 = vmatprep.subr.mxu0 0.0
    %111 = vmatpush1.msra.mxu0 0.0
    %112 = vmatprep.subr.mxu0 0.0
    %113 = vmatpush1.msra.mxu0 0.0
    %114 = vmatprep.subr.mxu0 0.0
    %115 = vmatpush1.msra.mxu0 0.0
    %116 = vmatprep.subr.mxu0 0.0
    %117 = vmatpush1.msra.mxu0 0.0
    %118 = vmatprep.subr.mxu0 0.0
    %119 = vmatpush1.msra.mxu0 0.0
    %120 = vmatprep.subr.mxu0 0.0
    %121 = vmatpush1.msra.mxu0 0.0
    %122 = vmatprep.subr.mxu0 0.0
    %123 = vmatpush1.msra.mxu0 0.0
    %124 = vmatprep.subr.mxu0 0.0
    %125 = vmatpush1.msra.mxu0 0.0
    %126 = vmatprep.subr.mxu0 0.0
    %127 = vmatpush1.msra.mxu0 0.0
    %128 = vmatprep.mubr.f32.mxu0 0.0
    %129 = vmatmul.mubr.f32.gmra.mrb[0].mxu0 %v62
    %v130 = vpop.f32.mrb[0].mxu0
    %v131 = vadd.f32 0.0, %v130
    %v132 = vpop.f32.mrb[0].mxu0
    %v133 = vadd.f32 0.0, %v132
    %134 = vdwg.mxu0
    %135 = vmatprep.subr.mxu0 %v58
    %136 = vmatpush1.msra.mxu0 %v57
    %137 = vmatprep.subr.mxu0 0.0
    %138 = vmatpush1.msra.mxu0 0.0
    %139 = vmatprep.subr.mxu0 0.0
    %140 = vmatpush1.msra.mxu0 0.0
    %141 = vmatprep.subr.mxu0 0.0
    %142 = vmatpush1.msra.mxu0 0.0
    %143 = vmatprep.subr.mxu0 0.0
    %144 = vmatpush1.msra.mxu0 0.0
    %145 = vmatprep.subr.mxu0 0.0
    %146 = vmatpush1.msra.mxu0 0.0
    %147 = vmatprep.subr.mxu0 0.0
    %148 = vmatpush1.msra.mxu0 0.0
    %149 = vmatprep.subr.mxu0 0.0
    %150 = vmatpush1.msra.mxu0 0.0
    %151 = vmatprep.subr.mxu0 0.0
    %152 = vmatpush1.msra.mxu0 0.0
    %153 = vmatprep.subr.mxu0 0.0
    %154 = vmatpush1.msra.mxu0 0.0
    %155 = vmatprep.subr.mxu0 0.0
    %156 = vmatpush1.msra.mxu0 0.0
    %157 = vmatprep.subr.mxu0 0.0
    %158 = vmatpush1.msra.mxu0 0.0
    %159 = vmatprep.subr.mxu0 0.0
    %160 = vmatpush1.msra.mxu0 0.0
    %161 = vmatprep.subr.mxu0 0.0
    %162 = vmatpush1.msra.mxu0 0.0
    %163 = vmatprep.subr.mxu0 0.0
    %164 = vmatpush1.msra.mxu0 0.0
    %165 = vmatprep.subr.mxu0 0.0
    %166 = vmatpush1.msra.mxu0 0.0
    %167 = vmatprep.subr.mxu0 0.0
    %168 = vmatpush1.msra.mxu0 0.0
    %169 = vmatprep.subr.mxu0 0.0
    %170 = vmatpush1.msra.mxu0 0.0
    %171 = vmatprep.subr.mxu0 0.0
    %172 = vmatpush1.msra.mxu0 0.0
    %173 = vmatprep.subr.mxu0 0.0
    %174 = vmatpush1.msra.mxu0 0.0
    %175 = vmatprep.subr.mxu0 0.0
    %176 = vmatpush1.msra.mxu0 0.0
    %177 = vmatprep.subr.mxu0 0.0
    %178 = vmatpush1.msra.mxu0 0.0
    %179 = vmatprep.subr.mxu0 0.0
    %180 = vmatpush1.msra.mxu0 0.0
    %181 = vmatprep.subr.mxu0 0.0
    %182 = vmatpush1.msra.mxu0 0.0
    %183 = vmatprep.subr.mxu0 0.0
    %184 = vmatpush1.msra.mxu0 0.0
    %185 = vmatprep.subr.mxu0 0.0
    %186 = vmatpush1.msra.mxu0 0.0
    %187 = vmatprep.subr.mxu0 0.0
    %188 = vmatpush1.msra.mxu0 0.0
    %189 = vmatprep.subr.mxu0 0.0
    %190 = vmatpush1.msra.mxu0 0.0
    %191 = vmatprep.subr.mxu0 0.0
    %192 = vmatpush1.msra.mxu0 0.0
    %193 = vmatprep.subr.mxu0 0.0
    %194 = vmatpush1.msra.mxu0 0.0
    %195 = vmatprep.subr.mxu0 0.0
    %196 = vmatpush1.msra.mxu0 0.0
    %197 = vmatprep.subr.mxu0 0.0
    %198 = vmatpush1.msra.mxu0 0.0
    %199 = vmatprep.mubr.f32.mxu0 0.0
    %200 = vmatmul.mubr.f32.gmra.mrb[0].mxu0 %v62
    %v201 = vpop.f32.mrb[0].mxu0
    %v202 = vadd.f32 0.0, %v201
    %v203 = vpop.f32.mrb[0].mxu0
    %v204 = vadd.f32 0.0, %v203
    %205 = vdwg.mxu0
    %v206 = vxor.u32 %v131, 2147483648
    %v207 = vxor.u32 %v133, 2147483648
    %v208 = vxor.u32 %v202, 2147483648
    %v209 = vxor.u32 %v204, 2147483648
    %v210 = vmul.f32 %v206, 1.442695
    %v211 = vpow.pop %v210
    %v212 = vmul.f32 %v207, 1.442695
    %v213 = vpow.pop %v212
    %v214 = vmul.f32 %v208, 1.442695
    %v215 = vpow.pop %v214
    %v216 = vmul.f32 %v209, 1.442695
    %v217 = vpow.pop %v216
    %v218 = vadd.f32 %v211, 1.0
    %v219 = vadd.f32 %v213, 1.0
    %v220 = vadd.f32 %v215, 1.0
    %v221 = vadd.f32 %v217, 1.0
    %v222 = vrcp.pop %v218
    %v223 = vmul.f32 1.0, %v222
    %v224 = vrcp.pop %v219
    %v225 = vmul.f32 1.0, %v224
    %v226 = vrcp.pop %v220
    %v227 = vmul.f32 1.0, %v226
    %v228 = vrcp.pop %v221
    %v229 = vmul.f32 1.0, %v228
    %v230 = vmul.f32 %v131, %v223
    %v231 = vmul.f32 %v133, %v225
    %v232 = vmul.f32 %v202, %v227
    %v233 = vmul.f32 %v204, %v229
    %v234 = vlaneseq
    %v235 = vshrl.u32 %v234, 7
    %vm236 = vcmp.eq.s32.totalorder %v235, 2
    %v237 = vsel %vm236, 1.0, %v230
    %v238 = vsel %vm236, 1.0, %v231
    %v239 = vsel %vm236, 1.0, %v232
    %v240 = vsel %vm236, 1.0, %v233
    %241 = vrot.lane.b32.xlu0 %v237, 17
    %v242 = vpop.permute.xlu0 %241
    %243 = vrot.lane.b32.xlu0 %v238, 17
    %v244 = vpop.permute.xlu0 %243
    %245 = vrot.lane.b32.xlu0 %v239, 17
    %v246 = vpop.permute.xlu0 %245
    %247 = vrot.lane.b32.xlu0 %v240, 17
    %v248 = vpop.permute.xlu0 %247
    %v249 = vlaneseq
    %v250 = vand.u32 %v249, 127
    %vm251 = vcmp.lt.s32.totalorder %v250, 17
    %v252 = vsel %vm251, %v246, %v248
    %v253 = vsel %vm251, %v244, %v246
    %v254 = vsel %vm251, %v242, %v244
    %v255 = vsel %vm251, %v248, %v242
    %256 = vrot.lane.b32.xlu0 %v237, 16
    %v257 = vpop.permute.xlu0 %256
    %258 = vrot.lane.b32.xlu0 %v238, 16
    %v259 = vpop.permute.xlu0 %258
    %260 = vrot.lane.b32.xlu0 %v239, 16
    %v261 = vpop.permute.xlu0 %260
    %262 = vrot.lane.b32.xlu0 %v240, 16
    %v263 = vpop.permute.xlu0 %262
    %vm264 = vcmp.lt.s32.totalorder %v250, 16
    %v265 = vsel %vm264, %v261, %v263
    %v266 = vsel %vm264, %v259, %v261
    %v267 = vsel %vm264, %v257, %v259
    %v268 = vsel %vm264, %v263, %v257
    %269 = vrot.lane.b32.xlu0 %v237, 15
    %v270 = vpop.permute.xlu0 %269
    %271 = vrot.lane.b32.xlu0 %v238, 15
    %v272 = vpop.permute.xlu0 %271
    %273 = vrot.lane.b32.xlu0 %v239, 15
    %v274 = vpop.permute.xlu0 %273
    %275 = vrot.lane.b32.xlu0 %v240, 15
    %v276 = vpop.permute.xlu0 %275
    %vm277 = vcmp.lt.s32.totalorder %v250, 15
    %v278 = vsel %vm277, %v274, %v276
    %v279 = vsel %vm277, %v272, %v274
    %v280 = vsel %vm277, %v270, %v272
    %v281 = vsel %vm277, %v276, %v270
    %282 = vrot.lane.b32.xlu0 %v237, 1
    %v283 = vpop.permute.xlu0 %282
    %284 = vrot.lane.b32.xlu0 %v238, 1
    %v285 = vpop.permute.xlu0 %284
    %286 = vrot.lane.b32.xlu0 %v239, 1
    %v287 = vpop.permute.xlu0 %286
    %288 = vrot.lane.b32.xlu0 %v240, 1
    %v289 = vpop.permute.xlu0 %288
    %vm290 = vcmp.lt.s32.totalorder %v250, 1
    %v291 = vsel %vm290, %v287, %v289
    %v292 = vsel %vm290, %v285, %v287
    %v293 = vsel %vm290, %v283, %v285
    %v294 = vsel %vm290, %v289, %v283
    %295 = vrot.lane.b32.xlu0 %v237, 127
    %v296 = vpop.permute.xlu0 %295
    %297 = vrot.lane.b32.xlu0 %v238, 127
    %v298 = vpop.permute.xlu0 %297
    %299 = vrot.lane.b32.xlu0 %v239, 127
    %v300 = vpop.permute.xlu0 %299
    %301 = vrot.lane.b32.xlu0 %v240, 127
    %v302 = vpop.permute.xlu0 %301
    %vm303 = vcmp.lt.s32.totalorder %v250, 127
    %v304 = vsel %vm303, %v300, %v302
    %v305 = vsel %vm303, %v298, %v300
    %v306 = vsel %vm303, %v296, %v298
    %v307 = vsel %vm303, %v302, %v296
    %308 = vrot.lane.b32.xlu0 %v237, 113
    %v309 = vpop.permute.xlu0 %308
    %310 = vrot.lane.b32.xlu0 %v238, 113
    %v311 = vpop.permute.xlu0 %310
    %312 = vrot.lane.b32.xlu0 %v239, 113
    %v313 = vpop.permute.xlu0 %312
    %314 = vrot.lane.b32.xlu0 %v240, 113
    %v315 = vpop.permute.xlu0 %314
    %vm316 = vcmp.lt.s32.totalorder %v250, 113
    %v317 = vsel %vm316, %v313, %v315
    %v318 = vsel %vm316, %v311, %v313
    %v319 = vsel %vm316, %v309, %v311
    %v320 = vsel %vm316, %v315, %v309
    %321 = vrot.lane.b32.xlu0 %v237, 112
    %v322 = vpop.permute.xlu0 %321
    %323 = vrot.lane.b32.xlu0 %v238, 112
    %v324 = vpop.permute.xlu0 %323
    %325 = vrot.lane.b32.xlu0 %v239, 112
    %v326 = vpop.permute.xlu0 %325
    %327 = vrot.lane.b32.xlu0 %v240, 112
    %v328 = vpop.permute.xlu0 %327
    %vm329 = vcmp.lt.s32.totalorder %v250, 112
    %v330 = vsel %vm329, %v326, %v328
    %v331 = vsel %vm329, %v324, %v326
    %v332 = vsel %vm329, %v322, %v324
    %v333 = vsel %vm329, %v328, %v322
    %334 = vrot.lane.b32.xlu0 %v237, 111
    %v335 = vpop.permute.xlu0 %334
    %336 = vrot.lane.b32.xlu0 %v238, 111
    %v337 = vpop.permute.xlu0 %336
    %338 = vrot.lane.b32.xlu0 %v239, 111
    %v339 = vpop.permute.xlu0 %338
    %340 = vrot.lane.b32.xlu0 %v240, 111
    %v341 = vpop.permute.xlu0 %340
    %vm342 = vcmp.lt.s32.totalorder %v250, 111
    %v343 = vsel %vm342, %v339, %v341
    %v344 = vsel %vm342, %v337, %v339
    %v345 = vsel %vm342, %v335, %v337
    %v346 = vsel %vm342, %v341, %v335
    %v347 = vld [vmem:[#allocation5] sm:$0xff]
    %v348 = vld [vmem:[#allocation5 + $0x8] sm:$0xff]
    %v349 = vld [vmem:[#allocation5 + $0x10] sm:$0xff]
    %v350 = vld [vmem:[#allocation5 + $0x18] sm:$0xff]
    %v351 = vld [vmem:[#allocation5 + $0x20] sm:$0xff]
    %v352 = vld [vmem:[#allocation5 + $0x28] sm:$0xff]
    %v353 = vld [vmem:[#allocation5 + $0x30] sm:$0xff]
    %v354 = vld [vmem:[#allocation5 + $0x38] sm:$0xff]
    %v355 = vld [vmem:[#allocation5 + $0x40] sm:$0xff]
    %v356 = vld [vmem:[#allocation5 + $0x48] sm:$0xff]
    %v357 = vld [vmem:[#allocation5 + $0x50] sm:$0xff]
    %v358 = vld [vmem:[#allocation5 + $0x58] sm:$0xff]
    %v359 = vld [vmem:[#allocation5 + $0x60] sm:$0xff]
    %v360 = vld [vmem:[#allocation5 + $0x68] sm:$0xff]
    %v361 = vld [vmem:[#allocation5 + $0x70] sm:$0xff]
    %v362 = vld [vmem:[#allocation5 + $0x78] sm:$0xff]
    %v363 = vld [vmem:[#allocation5 + $0x80] sm:$0xff]
    %v364 = vld [vmem:[#allocation5 + $0x88] sm:$0xff]
    %v365 = vld [vmem:[#allocation5 + $0x90] sm:$0xff]
    %v366 = vld [vmem:[#allocation5 + $0x98] sm:$0xff]
    %v367 = vld [vmem:[#allocation5 + $0xa0] sm:$0xff]
    %v368 = vld [vmem:[#allocation5 + $0xa8] sm:$0xff]
    %v369 = vld [vmem:[#allocation5 + $0xb0] sm:$0xff]
    %v370 = vld [vmem:[#allocation5 + $0xb8] sm:$0xff]
    %v371 = vld [vmem:[#allocation5 + $0xc0] sm:$0xff]
    %v372 = vld [vmem:[#allocation5 + $0xc8] sm:$0xff]
    %v373 = vld [vmem:[#allocation5 + $0xd0] sm:$0xff]
    %v374 = vld [vmem:[#allocation5 + $0xd8] sm:$0xff]
    %v375 = vld [vmem:[#allocation5 + $0xe0] sm:$0xff]
    %v376 = vld [vmem:[#allocation5 + $0xe8] sm:$0xff]
    %v377 = vld [vmem:[#allocation5 + $0xf0] sm:$0xff]
    %v378 = vld [vmem:[#allocation5 + $0xf8] sm:$0xff]
    %v379 = vld [vmem:[#allocation5 + $0x100] sm:$0xff]
    %v380 = vld [vmem:[#allocation5 + $0x108] sm:$0xff]
    %v381 = vld [vmem:[#allocation5 + $0x110] sm:$0xff]
    %v382 = vld [vmem:[#allocation5 + $0x118] sm:$0xff]
    %v383 = vmul.f32 %v255, %v347
    %v384 = vmul.f32 %v254, %v348
    %v385 = vmul.f32 %v253, %v349
    %v386 = vmul.f32 %v252, %v350
    %v387 = vmul.f32 %v268, %v351
    %v388 = vmul.f32 %v267, %v352
    %v389 = vmul.f32 %v266, %v353
    %v390 = vmul.f32 %v265, %v354
    %v391 = vmul.f32 %v281, %v355
    %v392 = vmul.f32 %v280, %v356
    %v393 = vmul.f32 %v279, %v357
    %v394 = vmul.f32 %v278, %v358
    %v395 = vmul.f32 %v294, %v359
    %v396 = vmul.f32 %v293, %v360
    %v397 = vmul.f32 %v292, %v361
    %v398 = vmul.f32 %v291, %v362
    %v399 = vmul.f32 %v237, %v363
    %v400 = vmul.f32 %v238, %v364
    %v401 = vmul.f32 %v239, %v365
    %v402 = vmul.f32 %v240, %v366
    %v403 = vmul.f32 %v306, %v367
    %v404 = vmul.f32 %v305, %v368
    %v405 = vmul.f32 %v304, %v369
    %v406 = vmul.f32 %v307, %v370
    %v407 = vmul.f32 %v319, %v371
    %v408 = vmul.f32 %v318, %v372
    %v409 = vmul.f32 %v317, %v373
    %v410 = vmul.f32 %v320, %v374
    %v411 = vmul.f32 %v332, %v375
    %v412 = vmul.f32 %v331, %v376
    %v413 = vmul.f32 %v330, %v377
    %v414 = vmul.f32 %v333, %v378
    %v415 = vmul.f32 %v345, %v379
    %v416 = vmul.f32 %v344, %v380
    %v417 = vmul.f32 %v343, %v381
    %v418 = vmul.f32 %v346, %v382
    %v419 = vld [vmem:[%s3] sm:$0xff]
    %vm420 = vcmask 588800
    %v422 = vsel %vm420, %v419, 0
    %424 = vmatprep.subr.mxu0 %v384
    %425 = vmatpush1.msra.mxu0 %v383
    %426 = vmatprep.subr.mxu0 %v388
    %427 = vmatpush1.msra.mxu0 %v387
    %428 = vmatprep.subr.mxu0 %v392
    %429 = vmatpush1.msra.mxu0 %v391
    %430 = vmatprep.subr.mxu0 %v396
    %431 = vmatpush1.msra.mxu0 %v395
    %432 = vmatprep.subr.mxu0 %v400
    %433 = vmatpush1.msra.mxu0 %v399
    %434 = vmatprep.subr.mxu0 %v404
    %435 = vmatpush1.msra.mxu0 %v403
    %436 = vmatprep.subr.mxu0 %v408
    %437 = vmatpush1.msra.mxu0 %v407
    %438 = vmatprep.subr.mxu0 %v412
    %439 = vmatpush1.msra.mxu0 %v411
    %440 = vmatprep.subr.mxu0 %v416
    %441 = vmatpush1.msra.mxu0 %v415
    %442 = vmatprep.subr.mxu0 0.0
    %443 = vmatpush1.msra.mxu0 0.0
    %444 = vmatprep.subr.mxu0 0.0
    %445 = vmatpush1.msra.mxu0 0.0
    %446 = vmatprep.subr.mxu0 0.0
    %447 = vmatpush1.msra.mxu0 0.0
    %448 = vmatprep.subr.mxu0 0.0
    %449 = vmatpush1.msra.mxu0 0.0
    %450 = vmatprep.subr.mxu0 0.0
    %451 = vmatpush1.msra.mxu0 0.0
    %452 = vmatprep.subr.mxu0 0.0
    %453 = vmatpush1.msra.mxu0 0.0
    %454 = vmatprep.subr.mxu0 0.0
    %455 = vmatpush1.msra.mxu0 0.0
    %456 = vmatprep.subr.mxu0 0.0
    %457 = vmatpush1.msra.mxu0 0.0
    %458 = vmatprep.subr.mxu0 0.0
    %459 = vmatpush1.msra.mxu0 0.0
    %460 = vmatprep.subr.mxu0 0.0
    %461 = vmatpush1.msra.mxu0 0.0
    %462 = vmatprep.subr.mxu0 0.0
    %463 = vmatpush1.msra.mxu0 0.0
    %464 = vmatprep.subr.mxu0 0.0
    %465 = vmatpush1.msra.mxu0 0.0
    %466 = vmatprep.subr.mxu0 0.0
    %467 = vmatpush1.msra.mxu0 0.0
    %468 = vmatprep.subr.mxu0 0.0
    %469 = vmatpush1.msra.mxu0 0.0
    %470 = vmatprep.subr.mxu0 0.0
    %471 = vmatpush1.msra.mxu0 0.0
    %472 = vmatprep.subr.mxu0 0.0
    %473 = vmatpush1.msra.mxu0 0.0
    %474 = vmatprep.subr.mxu0 0.0
    %475 = vmatpush1.msra.mxu0 0.0
    %476 = vmatprep.subr.mxu0 0.0
    %477 = vmatpush1.msra.mxu0 0.0
    %478 = vmatprep.subr.mxu0 0.0
    %479 = vmatpush1.msra.mxu0 0.0
    %480 = vmatprep.subr.mxu0 0.0
    %481 = vmatpush1.msra.mxu0 0.0
    %482 = vmatprep.subr.mxu0 0.0
    %483 = vmatpush1.msra.mxu0 0.0
    %484 = vmatprep.subr.mxu0 0.0
    %485 = vmatpush1.msra.mxu0 0.0
    %486 = vmatprep.subr.mxu0 0.0
    %487 = vmatpush1.msra.mxu0 0.0
    %488 = vmatprep.mubr.f32.mxu0 0.0
    %489 = vmatmul.mubr.f32.gmra.mrb[0].mxu0 %v422
    %v490 = vpop.f32.mrb[0].mxu0
    %v491 = vadd.f32 0.0, %v490
    %v492 = vpop.f32.mrb[0].mxu0
    %v493 = vadd.f32 0.0, %v492
    %494 = vdwg.mxu0
    %495 = vmatprep.subr.mxu0 %v386
    %496 = vmatpush1.msra.mxu0 %v385
    %497 = vmatprep.subr.mxu0 %v390
    %498 = vmatpush1.msra.mxu0 %v389
    %499 = vmatprep.subr.mxu0 %v394
    %500 = vmatpush1.msra.mxu0 %v393
    %501 = vmatprep.subr.mxu0 %v398
    %502 = vmatpush1.msra.mxu0 %v397
    %503 = vmatprep.subr.mxu0 %v402
    %504 = vmatpush1.msra.mxu0 %v401
    %505 = vmatprep.subr.mxu0 %v406
    %506 = vmatpush1.msra.mxu0 %v405
    %507 = vmatprep.subr.mxu0 %v410
    %508 = vmatpush1.msra.mxu0 %v409
    %509 = vmatprep.subr.mxu0 %v414
    %510 = vmatpush1.msra.mxu0 %v413
    %511 = vmatprep.subr.mxu0 %v418
    %512 = vmatpush1.msra.mxu0 %v417
    %513 = vmatprep.subr.mxu0 0.0
    %514 = vmatpush1.msra.mxu0 0.0
    %515 = vmatprep.subr.mxu0 0.0
    %516 = vmatpush1.msra.mxu0 0.0
    %517 = vmatprep.subr.mxu0 0.0
    %518 = vmatpush1.msra.mxu0 0.0
    %519 = vmatprep.subr.mxu0 0.0
    %520 = vmatpush1.msra.mxu0 0.0
    %521 = vmatprep.subr.mxu0 0.0
    %522 = vmatpush1.msra.mxu0 0.0
    %523 = vmatprep.subr.mxu0 0.0
    %524 = vmatpush1.msra.mxu0 0.0
    %525 = vmatprep.subr.mxu0 0.0
    %526 = vmatpush1.msra.mxu0 0.0
    %527 = vmatprep.subr.mxu0 0.0
    %528 = vmatpush1.msra.mxu0 0.0
    %529 = vmatprep.subr.mxu0 0.0
    %530 = vmatpush1.msra.mxu0 0.0
    %531 = vmatprep.subr.mxu0 0.0
    %532 = vmatpush1.msra.mxu0 0.0
    %533 = vmatprep.subr.mxu0 0.0
    %534 = vmatpush1.msra.mxu0 0.0
    %535 = vmatprep.subr.mxu0 0.0
    %536 = vmatpush1.msra.mxu0 0.0
    %537 = vmatprep.subr.mxu0 0.0
    %538 = vmatpush1.msra.mxu0 0.0
    %539 = vmatprep.subr.mxu0 0.0
    %540 = vmatpush1.msra.mxu0 0.0
    %541 = vmatprep.subr.mxu0 0.0
    %542 = vmatpush1.msra.mxu0 0.0
    %543 = vmatprep.subr.mxu0 0.0
    %544 = vmatpush1.msra.mxu0 0.0
    %545 = vmatprep.subr.mxu0 0.0
    %546 = vmatpush1.msra.mxu0 0.0
    %547 = vmatprep.subr.mxu0 0.0
    %548 = vmatpush1.msra.mxu0 0.0
    %549 = vmatprep.subr.mxu0 0.0
    %550 = vmatpush1.msra.mxu0 0.0
    %551 = vmatprep.subr.mxu0 0.0
    %552 = vmatpush1.msra.mxu0 0.0
    %553 = vmatprep.subr.mxu0 0.0
    %554 = vmatpush1.msra.mxu0 0.0
    %555 = vmatprep.subr.mxu0 0.0
    %556 = vmatpush1.msra.mxu0 0.0
    %557 = vmatprep.subr.mxu0 0.0
    %558 = vmatpush1.msra.mxu0 0.0
    %559 = vmatprep.mubr.f32.mxu0 0.0
    %560 = vmatmul.mubr.f32.gmra.mrb[0].mxu0 %v422
    %v561 = vpop.f32.mrb[0].mxu0
    %v562 = vadd.f32 0.0, %v561
    %v563 = vpop.f32.mrb[0].mxu0
    %v564 = vadd.f32 0.0, %v563
    %565 = vdwg.mxu0
    %v566 = vxor.u32 %v491, 2147483648
    %v567 = vxor.u32 %v493, 2147483648
    %v568 = vxor.u32 %v562, 2147483648
    %v569 = vxor.u32 %v564, 2147483648
    %v570 = vmul.f32 %v566, 1.442695
    %v571 = vpow.pop %v570
    %v572 = vmul.f32 %v567, 1.442695
    %v573 = vpow.pop %v572
    %v574 = vmul.f32 %v568, 1.442695
    %v575 = vpow.pop %v574
    %v576 = vmul.f32 %v569, 1.442695
    %v577 = vpow.pop %v576
    %v578 = vadd.f32 %v571, 1.0
    %v579 = vadd.f32 %v573, 1.0
    %v580 = vadd.f32 %v575, 1.0
    %v581 = vadd.f32 %v577, 1.0
    %v582 = vrcp.pop %v578
    %v583 = vmul.f32 1.0, %v582
    %v584 = vrcp.pop %v579
    %v585 = vmul.f32 1.0, %v584
    %v586 = vrcp.pop %v580
    %v587 = vmul.f32 1.0, %v586
    %v588 = vrcp.pop %v581
    %v589 = vmul.f32 1.0, %v588
    %v590 = vmul.f32 %v491, %v583
    %v591 = vmul.f32 %v493, %v585
    %v592 = vmul.f32 %v562, %v587
    %v593 = vmul.f32 %v564, %v589
    %v594 = vadd.f32 %v590, %v55
    %v595 = vadd.f32 %v591, %v56
    %v596 = vadd.f32 %v592, %v57
    %v597 = vadd.f32 %v593, %v58
    %598 = vst [vmem:[#allocation8] sm:$0xff] %v594
    %599 = vst [vmem:[#allocation8 + $0x8] sm:$0xff] %v595
    %600 = vst [vmem:[#allocation8 + $0x10] sm:$0xff] %v596
    %601 = vst [vmem:[#allocation8 + $0x18] sm:$0xff] %v597
    // Predicated region
    $region30: #{tpu_custom_call.1} parent=1 // pred_check
      _
    $region31: #{tpu_custom_call.1} parent=1 // pred_check_branch
      %603 = sbr.rel (0) target = $region33
    $region32: #{tpu_custom_call.1} parent=1 // pred_region
      %s605 = ssub.s32 512, 512
      %606 = vsyncadd [#allocation4], %s605
      %s608 = sshll.u32 [#allocation8], 4
      %s609 = int_to_ptr.vmem [resolvable:$true] %s608
      %611 = dma.vmem_to_hbm [thread:$0]  %s609, 512, %s4, [#allocation4]
    $region33: #{tpu_custom_call.1} parent=1 // pred_fallthru
      _
    // Predicated region
    $region34: #{tpu_custom_call.1} parent=1 // pred_check
      _
    $region35: #{tpu_custom_call.1} parent=1 // pred_check_branch
      %613 = sbr.rel (0) target = $region37
    $region36: #{tpu_custom_call.1} parent=1 // pred_region
      %614 = dma.done [#allocation4], 512
    $region37: #{tpu_custom_call.1} parent=1 // pred_fallthru
      _
    %615 = vsyncpa [#allocation3], 1
    %616 = vsyncpa [#allocation6], 1
    %617 = vsyncpa [#allocation4], 1

</llo_original>
